<compile_context>
chip_gen: v5e
topology: v5e:2x2
jax: 0.10.0
libtpu: 0.0.40
codegen_flags: <defaults>
</compile_context>

<pallas_src>
import jax
import jax.numpy as jnp
from jax.experimental import pallas as pl
from jax.experimental.pallas import tpu as pltpu


def _round_up(n, m):
    return ((n + m - 1) // m) * m


def _cdiv(a, b):
    return (a + b - 1) // b


def textnn_kernel(x_ref, w1_ref, b1_ref, w2_ref, b2_ref, o_ref):
    # In-kernel f32 -> bf16 cast (free on the VPU; avoids a separate XLA cast pass on x).
    x = x_ref[...].astype(w1_ref.dtype)
    # fc1: (TB, F)bf16 @ (F, H)bf16 -> f32 accumulation on the MXU.
    h = jnp.dot(x, w1_ref[...], preferred_element_type=jnp.float32)
    # bias + ReLU epilogue in f32 (dropout p=0.3 is identity in eval mode).
    h = jnp.maximum(h + b1_ref[...], 0.0)
    # fc2: (TB, H)bf16 @ (H, C)bf16 -> f32; narrow C kept unpadded (small writeback).
    out = jnp.dot(h.astype(w2_ref.dtype), w2_ref[...],
                  preferred_element_type=jnp.float32)
    o_ref[...] = (out + b2_ref[...]).astype(o_ref.dtype)


def prepare_params(w1, b1, w2, b2, compute_dtype=jnp.bfloat16):
    """One-time (init-time) cast/reshape of parameters; not repeated per forward call."""
    return (
        w1.astype(compute_dtype),
        jnp.asarray(b1, jnp.float32).reshape(1, -1),
        w2.astype(compute_dtype),
        jnp.asarray(b2, jnp.float32).reshape(1, -1),
    )


def textnn_forward(x, params, *, block_b=2048):
    """x: (B, F) f32; params = prepare_params(...). Returns (B, C) f32 logits."""
    w1, b1, w2, b2 = params
    B, F = x.shape
    F_, H = w1.shape
    H_, C = w2.shape
    assert F == F_ and H == H_

    # Batch tile: big enough to amortize per-step grid overhead, but keep >= 2 grid steps
    # when B allows so both TensorCores are used on v7x. Always a multiple of 8 (sublanes).
    TB = min(block_b, _round_up(max(_cdiv(B, 2), 1), 8))
    grid = (_cdiv(B, TB),)  # Pallas masks the partial last block; no explicit padding.

    cost = pl.CostEstimate(
        flops=2 * B * (F * H + H * C),
        transcendentals=0,
        bytes_accessed=(B * F * 4            # x read (f32)
                        + F * H * 2 + H * 4  # w1 (bf16) + b1 (f32)
                        + H * C * 2 + C * 4  # w2 (bf16) + b2 (f32)
                        + B * C * 4),        # logits write (f32, narrow C)
    )

    return pl.pallas_call(
        textnn_kernel,
        out_shape=jax.ShapeDtypeStruct((B, C), jnp.float32),
        grid_spec=pl.GridSpec(
            grid=grid,
            in_specs=[
                pl.BlockSpec((TB, F), lambda i: (i, 0)),   # x: tiled on batch (f32)
                pl.BlockSpec((F, H), lambda i: (0, 0)),    # w1: whole, resident (bf16)
                pl.BlockSpec((1, H), lambda i: (0, 0)),    # b1 (f32)
                pl.BlockSpec((H, C), lambda i: (0, 0)),    # w2: narrow, unpadded (bf16)
                pl.BlockSpec((1, C), lambda i: (0, 0)),    # b2 (f32)
            ],
            out_specs=pl.BlockSpec((TB, C), lambda i: (i, 0)),  # narrow writeback
        ),
        compiler_params=pltpu.CompilerParams(
            # Batch blocks are independent -> shard across TCs on v7x, pipeline everywhere.
            dimension_semantics=("parallel",),
        ),
        cost_estimate=cost,
    )(x, w1, b1, w2, b2)


def init_params(key, input_size, hidden, num_classes):
    # Deterministic init mimicking nn.Linear's U(-1/sqrt(fan_in), +1/sqrt(fan_in)).
    k1, k2, k3, k4 = jax.random.split(key, 4)
    bound1 = 1.0 / jnp.sqrt(jnp.float32(input_size))
    bound2 = 1.0 / jnp.sqrt(jnp.float32(hidden))
    # Stored as (in, out): equivalent to PyTorch weight.T
    w1 = jax.random.uniform(k1, (input_size, hidden), jnp.float32, -bound1, bound1)
    b1 = jax.random.uniform(k2, (hidden,), jnp.float32, -bound1, bound1)
    w2 = jax.random.uniform(k3, (hidden, num_classes), jnp.float32, -bound2, bound2)
    b2 = jax.random.uniform(k4, (num_classes,), jnp.float32, -bound2, bound2)
    return w1, b1, w2, b2


def _ref_bf16(x, w1, b1, w2, b2):
    # Pure-JAX reference mirroring the kernel's bf16-operand / f32-accumulate math.
    xb = x.astype(jnp.bfloat16)
    h = jnp.maximum(
        jnp.dot(xb, w1.astype(jnp.bfloat16), preferred_element_type=jnp.float32)
        + b1.reshape(1, -1), 0.0)
    return (jnp.dot(h.astype(jnp.bfloat16), w2.astype(jnp.bfloat16),
                    preferred_element_type=jnp.float32) + b2.reshape(1, -1))


if __name__ == "__main__":
    input_size = 32
    hidden = 128        # fixed by the module (fc1: input_size -> 128)
    num_classes = 2     # fixed by the module (fc2: 128 -> 2)

    key = jax.random.PRNGKey(0)
    kx, kp, kx2 = jax.random.split(key, 3)
    w1, b1, w2, b2 = init_params(kp, input_size, hidden, num_classes)
    params = prepare_params(w1, b1, w2, b2)

    # Case 1: small batch that fits one tile.
    batch = 8
    x = jax.random.normal(kx, (batch, input_size), jnp.float32)
    out = textnn_forward(x, params)
    jax.block_until_ready(out)
    assert out.shape == (batch, num_classes)

    ref = _ref_bf16(x, w1, b1, w2, b2)
    assert jnp.allclose(out, ref, atol=1e-2, rtol=1e-2), (
        f"max abs err {jnp.max(jnp.abs(out - ref))}")
    ref_f32 = jnp.maximum(x @ w1 + b1.reshape(1, -1), 0.0) @ w2 + b2.reshape(1, -1)
    assert jnp.allclose(out, ref_f32, atol=5e-2, rtol=5e-2)

    # Case 2: batch that does NOT divide the tile (exercises masked edge block).
    batch2 = 20
    x2 = jax.random.normal(kx2, (batch2, input_size), jnp.float32)
    out2 = textnn_forward(x2, params)
    jax.block_until_ready(out2)
    assert out2.shape == (batch2, num_classes)
    ref2 = _ref_bf16(x2, w1, b1, w2, b2)
    assert jnp.allclose(out2, ref2, atol=1e-2, rtol=1e-2), (
        f"max abs err {jnp.max(jnp.abs(out2 - ref2))}")

    print("KERNEL_OK")
</pallas_src>

<mosaic_0001>
module attributes {stable_mosaic.version = 11 : i64} {
  func.func @textnn_kernel(%arg0: i32, %arg1: memref<8x32xf32, #tpu.memory_space<vmem>>, %arg2: memref<32x128xbf16, #tpu.memory_space<vmem>>, %arg3: memref<1x128xf32, #tpu.memory_space<vmem>>, %arg4: memref<128x2xbf16, #tpu.memory_space<vmem>>, %arg5: memref<1x2xf32, #tpu.memory_space<vmem>>, %arg6: memref<8x2xf32, #tpu.memory_space<vmem>>) attributes {dimension_semantics = [#tpu.dimension_semantics<parallel>], iteration_bounds = array<i64: 1>, scalar_prefetch = 0 : i64, scratch_operands = 0 : i64, tpu.core_type = #tpu.core_type<tc>, window_params = [{transform_indices = @transform_0, window_bounds = array<i64: 8, 32>}, {pipeline_mode = #tpu.pipeline_mode<synchronous>, transform_indices = @transform_1, window_bounds = array<i64: 32, 128>}, {pipeline_mode = #tpu.pipeline_mode<synchronous>, transform_indices = @transform_2, window_bounds = array<i64: 1, 128>}, {pipeline_mode = #tpu.pipeline_mode<synchronous>, transform_indices = @transform_3, window_bounds = array<i64: 128, 2>}, {pipeline_mode = #tpu.pipeline_mode<synchronous>, transform_indices = @transform_4, window_bounds = array<i64: 1, 2>}, {transform_indices = @transform_5, window_bounds = array<i64: 8, 2>}]} {
    %c0 = arith.constant 0 : index
    %c0_0 = arith.constant 0 : index
    %0 = vector.load %arg1[%c0, %c0_0] : memref<8x32xf32, #tpu.memory_space<vmem>>, vector<8x32xf32>
    %1 = arith.truncf %0 : vector<8x32xf32> to vector<8x32xbf16>
    %c0_1 = arith.constant 0 : index
    %c0_2 = arith.constant 0 : index
    %2 = vector.load %arg2[%c0_1, %c0_2] : memref<32x128xbf16, #tpu.memory_space<vmem>>, vector<32x128xbf16>
    %cst = arith.constant dense<0.000000e+00> : vector<8x128xf32>
    %3 = tpu.matmul %1, %2, %cst {dimension_numbers = #tpu.dot_dimension_numbers<[1], [0], [0], [1], [0, 0, 1, 1], [], []>} : vector<8x32xbf16>, vector<32x128xbf16>, vector<8x128xf32> -> vector<8x128xf32>
    %c0_3 = arith.constant 0 : index
    %c0_4 = arith.constant 0 : index
    %4 = vector.load %arg3[%c0_3, %c0_4] : memref<1x128xf32, #tpu.memory_space<vmem>>, vector<1x128xf32>
    %5 = vector.broadcast %4 : vector<1x128xf32> to vector<8x128xf32>
    %6 = arith.addf %3, %5 : vector<8x128xf32>
    %cst_5 = arith.constant 0.000000e+00 : f32
    %7 = vector.broadcast %cst_5 : f32 to vector<8x128xf32>
    %8 = arith.maximumf %6, %7 : vector<8x128xf32>
    %9 = arith.truncf %8 : vector<8x128xf32> to vector<8x128xbf16>
    %c0_6 = arith.constant 0 : index
    %c0_7 = arith.constant 0 : index
    %10 = vector.load %arg4[%c0_6, %c0_7] : memref<128x2xbf16, #tpu.memory_space<vmem>>, vector<128x2xbf16>
    %cst_8 = arith.constant dense<0.000000e+00> : vector<8x2xf32>
    %11 = tpu.matmul %9, %10, %cst_8 {dimension_numbers = #tpu.dot_dimension_numbers<[1], [0], [0], [1], [0, 0, 1, 1], [], []>} : vector<8x128xbf16>, vector<128x2xbf16>, vector<8x2xf32> -> vector<8x2xf32>
    %c0_9 = arith.constant 0 : index
    %c0_10 = arith.constant 0 : index
    %12 = vector.load %arg5[%c0_9, %c0_10] : memref<1x2xf32, #tpu.memory_space<vmem>>, vector<1x2xf32>
    %13 = vector.broadcast %12 : vector<1x2xf32> to vector<8x2xf32>
    %14 = arith.addf %11, %13 : vector<8x2xf32>
    %c0_11 = arith.constant 0 : index
    %c0_12 = arith.constant 0 : index
    %15 = vector.load %arg6[%c0_11, %c0_12] : memref<8x2xf32, #tpu.memory_space<vmem>>, vector<8x2xf32>
    tpu.vector_store %arg6[%c0_11, %c0_12], %14 {strides = array<i32>} : memref<8x2xf32, #tpu.memory_space<vmem>>, vector<8x2xf32>,
    return
  }
  func.func @transform_0(%arg0: i32) -> (i32, i32) {
    %c0_i32 = arith.constant 0 : i32
    %c0_i32_0 = arith.constant 0 : i32
    return %arg0, %c0_i32 : i32, i32
  }
  func.func @transform_1(%arg0: i32) -> (i32, i32) {
    %c0_i32 = arith.constant 0 : i32
    %c0_i32_0 = arith.constant 0 : i32
    %c0_i32_1 = arith.constant 0 : i32
    return %c0_i32, %c0_i32_0 : i32, i32
  }
  func.func @transform_2(%arg0: i32) -> (i32, i32) {
    %c0_i32 = arith.constant 0 : i32
    %c0_i32_0 = arith.constant 0 : i32
    %c0_i32_1 = arith.constant 0 : i32
    return %c0_i32, %c0_i32_0 : i32, i32
  }
  func.func @transform_3(%arg0: i32) -> (i32, i32) {
    %c0_i32 = arith.constant 0 : i32
    %c0_i32_0 = arith.constant 0 : i32
    %c0_i32_1 = arith.constant 0 : i32
    return %c0_i32, %c0_i32_0 : i32, i32
  }
  func.func @transform_4(%arg0: i32) -> (i32, i32) {
    %c0_i32 = arith.constant 0 : i32
    %c0_i32_0 = arith.constant 0 : i32
    %c0_i32_1 = arith.constant 0 : i32
    return %c0_i32, %c0_i32_0 : i32, i32
  }
  func.func @transform_5(%arg0: i32) -> (i32, i32) {
    %c0_i32 = arith.constant 0 : i32
    %c0_i32_0 = arith.constant 0 : i32
    return %arg0, %c0_i32 : i32, i32
  }
}

</mosaic_0001>

<llo_original>
// kernel: tpu_custom_call.1
$region0: #{tpu_custom_call.1}
  #allocation0 [shape = 'u32[]', space=smem, size = 0x4, offset = 0x4, fixed_abs, tag = 'smem constant byte address 0x4 - core index']
  #allocation1 [shape = 'u32[72,128]{1,0:T(1,128)}', space=vmem, size = 0x9000, scoped, tag = 'internal scratch']
  %s0 = inlined_call_operand.vmem [shape: f32[8,32], index: 0, kind: input, shape index: {}]
  %s1 = inlined_call_operand.vmem [shape: bf16[32,128], index: 1, kind: input, shape index: {}]
  %s2 = inlined_call_operand.vmem [shape: f32[1,128], index: 2, kind: input, shape index: {}]
  %s3 = inlined_call_operand.vmem [shape: bf16[128,2], index: 3, kind: input, shape index: {}]
  %s4 = inlined_call_operand.vmem [shape: f32[1,2], index: 4, kind: input, shape index: {}]
  %s5 = inlined_call_operand.vmem [shape: f32[8,2], index: 5, kind: output, shape index: {}]
  %s6 = sld [smem:[#allocation0]]
  $region30: #{tpu_custom_call.1} parent=0
    _
  %s8 = ssub.s32 1, %s6
  %s9 = scalar_select 0, %s8, %s6
  // Predicated region
  $region2: #{tpu_custom_call.1} parent=0 // pred_check
    _
  $region3: #{tpu_custom_call.1} parent=0 // pred_check_branch
    %11 = sbr.rel (0) target = $region5
  $region4: #{tpu_custom_call.1} parent=0 // pred_region
    _
  $region5: #{tpu_custom_call.1} parent=0 // pred_fallthru
    _
  // Predicated region
  $region6: #{tpu_custom_call.1} parent=0 // pred_check
    _
  $region7: #{tpu_custom_call.1} parent=0 // pred_check_branch
    %13 = sbr.rel (0) target = $region9
  $region8: #{tpu_custom_call.1} parent=0 // pred_region
    _
  $region9: #{tpu_custom_call.1} parent=0 // pred_fallthru
    _
  // Predicated region
  $region10: #{tpu_custom_call.1} parent=0 // pred_check
    _
  $region11: #{tpu_custom_call.1} parent=0 // pred_check_branch
    %15 = sbr.rel (0) target = $region13
  $region12: #{tpu_custom_call.1} parent=0 // pred_region
    _
  $region13: #{tpu_custom_call.1} parent=0 // pred_fallthru
    _
  // Predicated region
  $region14: #{tpu_custom_call.1} parent=0 // pred_check
    _
  $region15: #{tpu_custom_call.1} parent=0 // pred_check_branch
    %17 = sbr.rel (0) target = $region17
  $region16: #{tpu_custom_call.1} parent=0 // pred_region
    _
  $region17: #{tpu_custom_call.1} parent=0 // pred_fallthru
    _
  // Predicated region
  $region18: #{tpu_custom_call.1} parent=0 // pred_check
    _
  $region19: #{tpu_custom_call.1} parent=0 // pred_check_branch
    %19 = sbr.rel (0) target = $region21
  $region20: #{tpu_custom_call.1} parent=0 // pred_region
    _
  $region21: #{tpu_custom_call.1} parent=0 // pred_fallthru
    _
  %v21 = vld [vmem:[%s0] sm:$0xff]
  %v22 = vpack.c.bf16 %v21, %v21
  %v23 = vld [vmem:[%s1] sm:$0xf]
  %v24 = vld [vmem:[%s1 + $0x4] sm:$0xf]
  %v25 = vld [vmem:[%s1 + $0x8] sm:$0xf]
  %v26 = vld [vmem:[%s1 + $0xc] sm:$0xf]
  %v27 = vld [vmem:[%s2] sm:$0x1]
  %v29 = vperm.slane %v27, 0
  %v35 = vunpack.c.l.b16 %v23
  %v36 = vunpack.c.l.b16 %v24
  %v37 = vunpack.c.l.b16 %v25
  %v38 = vunpack.c.l.b16 %v26
  %v39 = vpack.c.b16 %v36, %v35
  %v40 = vpack.c.b16 %v38, %v37
  %vm43 = vcmask 261120
  %v45 = vsel %vm43, %v22, 0
  %47 = vmatpush.bf16.msra.mxu0 0
  %48 = vmatpush.bf16.msra.mxu0 0
  %49 = vmatpush.bf16.msra.mxu0 0
  %50 = vmatpush.bf16.msra.mxu0 0
  %51 = vmatpush.bf16.msra.mxu0 0
  %52 = vmatpush.bf16.msra.mxu0 0
  %53 = vmatpush.bf16.msra.mxu0 %v40
  %54 = vmatpush.bf16.msra.mxu0 %v39
  %55 = vmatmul.bf16.gmra.mxu0 %v45
  %v56 = vpop.f32.mrf.mxu0
  %v57 = vadd.f32 %v29, %v56
  %v58 = vpop.f32.mrf.mxu0
  %59 = vdwg.mxu0
  %v60 = vmax.f32 %v57, 0.0
  %v61 = vpack.c.bf16 %v60, %v60
  %v62 = vld [vmem:[%s3] sm:$0xf]
  %v63 = vld [vmem:[%s3 + $0x4] sm:$0xf]
  %v64 = vld [vmem:[%s3 + $0x8] sm:$0xf]
  %v65 = vld [vmem:[%s3 + $0xc] sm:$0xf]
  %v66 = vld [vmem:[%s3 + $0x10] sm:$0xf]
  %v67 = vld [vmem:[%s3 + $0x14] sm:$0xf]
  %v68 = vld [vmem:[%s3 + $0x18] sm:$0xf]
  %v69 = vld [vmem:[%s3 + $0x1c] sm:$0xf]
  %v70 = vld [vmem:[%s3 + $0x20] sm:$0xf]
  %v71 = vld [vmem:[%s3 + $0x24] sm:$0xf]
  %v72 = vld [vmem:[%s3 + $0x28] sm:$0xf]
  %v73 = vld [vmem:[%s3 + $0x2c] sm:$0xf]
  %v74 = vld [vmem:[%s3 + $0x30] sm:$0xf]
  %v75 = vld [vmem:[%s3 + $0x34] sm:$0xf]
  %v76 = vld [vmem:[%s3 + $0x38] sm:$0xf]
  %v77 = vld [vmem:[%s3 + $0x3c] sm:$0xf]
  %v78 = vld [vmem:[%s4] sm:$0x1]
  %v80 = vperm.slane %v78, 0
  %v98 = vunpack.c.l.b16 %v62
  %v99 = vunpack.c.l.b16 %v63
  %v100 = vunpack.c.l.b16 %v64
  %v101 = vunpack.c.l.b16 %v65
  %v102 = vunpack.c.l.b16 %v66
  %v103 = vunpack.c.l.b16 %v67
  %v104 = vunpack.c.l.b16 %v68
  %v105 = vunpack.c.l.b16 %v69
  %v106 = vunpack.c.l.b16 %v70
  %v107 = vunpack.c.l.b16 %v71
  %v108 = vunpack.c.l.b16 %v72
  %v109 = vunpack.c.l.b16 %v73
  %v110 = vunpack.c.l.b16 %v74
  %v111 = vunpack.c.l.b16 %v75
  %v112 = vunpack.c.l.b16 %v76
  %v113 = vunpack.c.l.b16 %v77
  %v114 = vpack.c.b16 %v99, %v98
  %v115 = vpack.c.b16 %v101, %v100
  %v116 = vpack.c.b16 %v103, %v102
  %v117 = vpack.c.b16 %v105, %v104
  %v118 = vpack.c.b16 %v107, %v106
  %v119 = vpack.c.b16 %v109, %v108
  %v120 = vpack.c.b16 %v111, %v110
  %v121 = vpack.c.b16 %v113, %v112
  %130 = vmatpush.bf16.msra.mxu0 %v121
  %131 = vmatpush.bf16.msra.mxu0 %v120
  %132 = vmatpush.bf16.msra.mxu0 %v119
  %133 = vmatpush.bf16.msra.mxu0 %v118
  %134 = vmatpush.bf16.msra.mxu0 %v117
  %135 = vmatpush.bf16.msra.mxu0 %v116
  %136 = vmatpush.bf16.msra.mxu0 %v115
  %137 = vmatpush.bf16.msra.mxu0 %v114
  %138 = vmatmul.bf16.gmra.mxu0 %v61
  %v139 = vpop.f32.mrf.mxu0
  %v140 = vadd.f32 %v80, %v139
  %v141 = vpop.f32.mrf.mxu0
  %142 = vdwg.mxu0
  %vm143 = vcmask 15360
  %144 = vst.msk [vmem:[%s5] sm:$0xff] %vm143, %v140
  // Predicated region
  $region22: #{tpu_custom_call.1} parent=0 // pred_check
    _
  $region23: #{tpu_custom_call.1} parent=0 // pred_check_branch
    %146 = sbr.rel (0) target = $region25
  $region24: #{tpu_custom_call.1} parent=0 // pred_region
    _
  $region25: #{tpu_custom_call.1} parent=0 // pred_fallthru
    _
  // Predicated region
  $region26: #{tpu_custom_call.1} parent=0 // pred_check
    _
  $region27: #{tpu_custom_call.1} parent=0 // pred_check_branch
    %148 = sbr.rel (0) target = $region29
  $region28: #{tpu_custom_call.1} parent=0 // pred_region
    _
  $region29: #{tpu_custom_call.1} parent=0 // pred_fallthru
    _

</llo_original>
